<compile_context>
chip_gen: v7x
topology: tpu7x:2x2x1
jax: 0.10.0
libtpu: 0.0.40
codegen_flags: <defaults>
</compile_context>

<pallas_src>
import jax
import jax.numpy as jnp
from jax.experimental import pallas as pl
from jax.experimental.pallas import tpu as pltpu

NUM_FEATURES = 74
HIDDEN = 250
H_PAD = 256      # padded hidden dim (250 -> 256); zero padding is exact (tanh(0)=0)
EPS = 1e-5       # torch.nn.BatchNorm1d default


def _round_up(n, m):
    return ((n + m - 1) // m) * m


def _num_tensorcores_per_chip():
    """2 on v7x (megacore grid sharding), 1 on v5e/v6e."""
    try:
        kind = jax.devices()[0].device_kind.lower()
    except Exception:
        return 1
    return 2 if ("v7" in kind or "tpu7" in kind or "7x" in kind) else 1


def _batch_tiling(B, tb, n_cores):
    """Adaptive batch tiling: minimize zero-row padding, keep TB a multiple of 8,
    and (on v7x) keep the number of tiles a multiple of the TensorCore count."""
    n_tiles = pl.cdiv(B, tb)
    if n_cores > 1:
        n_tiles = _round_up(n_tiles, n_cores)
    # Never create tiles that would be entirely padding.
    n_tiles = max(1, min(n_tiles, pl.cdiv(B, 8)))
    TB = _round_up(pl.cdiv(B, n_tiles), 8)
    return TB, n_tiles


def _mlp_kernel(
    x_ref,
    w1_ref, b1_ref,
    w2_ref, b2_ref,
    w3_ref, b3_ref,
    w4_ref, b4_ref,
    w5_ref, b5_ref,
    out_ref,
):
    wdt = w1_ref.dtype  # bf16: MXU operand dtype (f32 accumulation)

    # x tile: (TB, 74) f32 (BatchNorm already folded into w1/b1); cast for the MXU.
    h = x_ref[...].astype(wdt)

    # 4 x (Linear -> Tanh); Dropout is identity in eval mode.
    # MXU operands bf16, accumulation f32; bias add + tanh stay in f32 (VPU/EUP).
    a = jnp.dot(h, w1_ref[...], preferred_element_type=jnp.float32) + b1_ref[...]
    h = jnp.tanh(a)
    a = jnp.dot(h.astype(wdt), w2_ref[...], preferred_element_type=jnp.float32) + b2_ref[...]
    h = jnp.tanh(a)
    a = jnp.dot(h.astype(wdt), w3_ref[...], preferred_element_type=jnp.float32) + b3_ref[...]
    h = jnp.tanh(a)
    a = jnp.dot(h.astype(wdt), w4_ref[...], preferred_element_type=jnp.float32) + b4_ref[...]
    h = jnp.tanh(a)

    # Final Linear(250 -> 1): VPU multiply + lane reduction (avoids an N=1 MXU
    # matmul whose only live output column is lane 0).  Padded lanes are exact
    # zeros in both h (tanh(0)=0) and w5.
    out = jnp.sum(h * w5_ref[...], axis=-1, keepdims=True)     # (TB, 1) f32
    out_ref[...] = out + b5_ref[...]


def neural_network_forward(x, params, *, tb=2048, weight_dtype=jnp.bfloat16):
    """x: (B, ...) with prod(...) == 74. Returns (B, 1) float32 logits."""
    B = x.shape[0]
    x = x.reshape(B, -1).astype(jnp.float32)                    # Flatten (glue, plain JAX)
    assert x.shape[1] == NUM_FEATURES

    # ---- Fold BatchNorm1d (eval mode) into the first Linear, in f32 ----
    gamma = params["gamma"].reshape(-1)
    beta = params["beta"].reshape(-1)
    mean = params["running_mean"].reshape(-1)
    var = params["running_var"].reshape(-1)
    scale = gamma * jax.lax.rsqrt(var + EPS)                     # (74,)
    shift = beta - mean * scale                                  # (74,)
    w1 = params["w1"] * scale[:, None]                           # (74, 250)
    b1 = params["b1"] + shift @ params["w1"]                     # (1, 250)

    # ---- Pad hidden dim 250 -> 256 (zero padding is exact) ----
    def pad2(a, rows, cols):
        return jnp.pad(a, ((0, rows - a.shape[0]), (0, cols - a.shape[1])))

    w1p = pad2(w1, NUM_FEATURES, H_PAD).astype(weight_dtype)     # (74, 256) bf16
    w2p = pad2(params["w2"], H_PAD, H_PAD).astype(weight_dtype)
    w3p = pad2(params["w3"], H_PAD, H_PAD).astype(weight_dtype)
    w4p = pad2(params["w4"], H_PAD, H_PAD).astype(weight_dtype)
    b1p = pad2(b1, 1, H_PAD)                                     # biases stay f32
    b2p = pad2(params["b2"], 1, H_PAD)
    b3p = pad2(params["b3"], 1, H_PAD)
    b4p = pad2(params["b4"], 1, H_PAD)
    w5p = pad2(params["w5"].T, 1, H_PAD).astype(jnp.float32)     # (1, 256) f32 row vector
    b5p = params["b5"].reshape(1, 1).astype(jnp.float32)

    # ---- Batch tiling: grid over batch, weights VMEM-resident ----
    TB, n_tiles = _batch_tiling(B, tb, _num_tensorcores_per_chip())
    B_pad = n_tiles * TB
    xp = x if B_pad == B else jnp.pad(x, ((0, B_pad - B), (0, 0)))  # batch tail only

    def const_spec(shape):
        return pl.BlockSpec(shape, lambda i: (0, 0))

    in_specs = [
        pl.BlockSpec((TB, NUM_FEATURES), lambda i: (i, 0)),      # x: streamed per batch tile
        const_spec((NUM_FEATURES, H_PAD)), const_spec((1, H_PAD)),   # w1, b1
        const_spec((H_PAD, H_PAD)), const_spec((1, H_PAD)),          # w2, b2
        const_spec((H_PAD, H_PAD)), const_spec((1, H_PAD)),          # w3, b3
        const_spec((H_PAD, H_PAD)), const_spec((1, H_PAD)),          # w4, b4
        const_spec((1, H_PAD)), const_spec((1, 1)),                   # w5 (row), b5
    ]
    out_spec = pl.BlockSpec((TB, 1), lambda i: (i, 0))

    out = pl.pallas_call(
        _mlp_kernel,
        out_shape=jax.ShapeDtypeStruct((B_pad, 1), jnp.float32),
        grid=(n_tiles,),
        in_specs=in_specs,
        out_specs=out_spec,
        compiler_params=pltpu.CompilerParams(
            dimension_semantics=("parallel",),
        ),
    )(xp, w1p, b1p, w2p, b2p, w3p, b3p, w4p, b4p, w5p, b5p)

    return out[:B]


def init_params(key):
    """Deterministic parameter initialization (shapes match the torch module)."""
    keys = jax.random.split(key, 16)

    def linear(kw, kb, fan_in, fan_out):
        # torch-style uniform(-1/sqrt(fan_in), 1/sqrt(fan_in)); stored as (in, out)
        bound = 1.0 / jnp.sqrt(jnp.float32(fan_in))
        w = jax.random.uniform(kw, (fan_in, fan_out), jnp.float32, -bound, bound)
        b = jax.random.uniform(kb, (1, fan_out), jnp.float32, -bound, bound)
        return w, b

    w1, b1 = linear(keys[0], keys[1], NUM_FEATURES, HIDDEN)
    w2, b2 = linear(keys[2], keys[3], HIDDEN, HIDDEN)
    w3, b3 = linear(keys[4], keys[5], HIDDEN, HIDDEN)
    w4, b4 = linear(keys[6], keys[7], HIDDEN, HIDDEN)
    w5, b5 = linear(keys[8], keys[9], HIDDEN, 1)

    return {
        "gamma": 1.0 + 0.1 * jax.random.normal(keys[10], (1, NUM_FEATURES), jnp.float32),
        "beta": 0.1 * jax.random.normal(keys[11], (1, NUM_FEATURES), jnp.float32),
        "running_mean": 0.5 * jax.random.normal(keys[12], (1, NUM_FEATURES), jnp.float32),
        "running_var": 1.0 + 0.1 * jax.random.uniform(keys[13], (1, NUM_FEATURES), jnp.float32),
        "w1": w1, "b1": b1,
        "w2": w2, "b2": b2,
        "w3": w3, "b3": b3,
        "w4": w4, "b4": b4,
        "w5": w5, "b5": b5,
    }


def reference_forward(x, params):
    """Pure-JAX f32 reference (unfused BN, unpadded weights)."""
    x = x.reshape(x.shape[0], -1)
    h = (x - params["running_mean"]) * jax.lax.rsqrt(params["running_var"] + EPS) \
        * params["gamma"] + params["beta"]
    h = jnp.tanh(h @ params["w1"] + params["b1"])
    h = jnp.tanh(h @ params["w2"] + params["b2"])
    h = jnp.tanh(h @ params["w3"] + params["b3"])
    h = jnp.tanh(h @ params["w4"] + params["b4"])
    return h @ params["w5"] + params["b5"]


if __name__ == "__main__":
    key = jax.random.PRNGKey(0)
    k_x, k_x2, k_x3, k_p = jax.random.split(key, 4)
    params = init_params(k_p)

    # bf16 MXU operands + f32 accumulation/epilogue -> loose-ish tolerance.
    atol = rtol = 5e-2

    # Small single-tile case (exercises batch-tail padding: 4 -> 8 rows).
    B = 4
    x = jax.random.normal(k_x, (B, NUM_FEATURES), jnp.float32)
    out = jax.block_until_ready(neural_network_forward(x, params))
    ref = reference_forward(x, params)
    assert out.shape == (B, 1), out.shape
    assert jnp.allclose(out, ref, atol=atol, rtol=rtol)

    # Medium case with the default (adaptive) tiling.
    B2 = 600
    x2 = jax.random.normal(k_x2, (B2, NUM_FEATURES), jnp.float32)
    out2 = jax.block_until_ready(neural_network_forward(x2, params))
    ref2 = reference_forward(x2, params)
    assert out2.shape == (B2, 1), out2.shape
    assert jnp.allclose(out2, ref2, atol=atol, rtol=rtol)

    # Multi-tile case with a batch tail (forces >=3 grid steps + padding).
    B3 = 601
    x3 = jax.random.normal(k_x3, (B3, NUM_FEATURES), jnp.float32)
    out3 = jax.block_until_ready(neural_network_forward(x3, params, tb=256))
    ref3 = reference_forward(x3, params)
    assert out3.shape == (B3, 1), out3.shape
    assert jnp.allclose(out3, ref3, atol=atol, rtol=rtol)

    print("KERNEL_OK")
</pallas_src>

<mosaic_0001>
module attributes {stable_mosaic.version = 11 : i64} {
  func.func @_mlp_kernel(%arg0: i32, %arg1: memref<8x74xf32, #tpu.memory_space<vmem>>, %arg2: memref<74x256xbf16, #tpu.memory_space<vmem>>, %arg3: memref<1x256xf32, #tpu.memory_space<vmem>>, %arg4: memref<256x256xbf16, #tpu.memory_space<vmem>>, %arg5: memref<1x256xf32, #tpu.memory_space<vmem>>, %arg6: memref<256x256xbf16, #tpu.memory_space<vmem>>, %arg7: memref<1x256xf32, #tpu.memory_space<vmem>>, %arg8: memref<256x256xbf16, #tpu.memory_space<vmem>>, %arg9: memref<1x256xf32, #tpu.memory_space<vmem>>, %arg10: memref<1x256xf32, #tpu.memory_space<vmem>>, %arg11: memref<1x1xf32, #tpu.memory_space<vmem>>, %arg12: memref<8x1xf32, #tpu.memory_space<vmem>>) attributes {dimension_semantics = [#tpu.dimension_semantics<parallel>], iteration_bounds = array<i64: 1>, scalar_prefetch = 0 : i64, scratch_operands = 0 : i64, tpu.core_type = #tpu.core_type<tc>, window_params = [{transform_indices = @transform_0, window_bounds = array<i64: 8, 74>}, {pipeline_mode = #tpu.pipeline_mode<synchronous>, transform_indices = @transform_1, window_bounds = array<i64: 74, 256>}, {pipeline_mode = #tpu.pipeline_mode<synchronous>, transform_indices = @transform_2, window_bounds = array<i64: 1, 256>}, {pipeline_mode = #tpu.pipeline_mode<synchronous>, transform_indices = @transform_3, window_bounds = array<i64: 256, 256>}, {pipeline_mode = #tpu.pipeline_mode<synchronous>, transform_indices = @transform_4, window_bounds = array<i64: 1, 256>}, {pipeline_mode = #tpu.pipeline_mode<synchronous>, transform_indices = @transform_5, window_bounds = array<i64: 256, 256>}, {pipeline_mode = #tpu.pipeline_mode<synchronous>, transform_indices = @transform_6, window_bounds = array<i64: 1, 256>}, {pipeline_mode = #tpu.pipeline_mode<synchronous>, transform_indices = @transform_7, window_bounds = array<i64: 256, 256>}, {pipeline_mode = #tpu.pipeline_mode<synchronous>, transform_indices = @transform_8, window_bounds = array<i64: 1, 256>}, {pipeline_mode = #tpu.pipeline_mode<synchronous>, transform_indices = @transform_9, window_bounds = array<i64: 1, 256>}, {pipeline_mode = #tpu.pipeline_mode<synchronous>, transform_indices = @transform_10, window_bounds = array<i64: 1, 1>}, {transform_indices = @transform_11, window_bounds = array<i64: 8, 1>}]} {
    %c0 = arith.constant 0 : index
    %c0_0 = arith.constant 0 : index
    %0 = vector.load %arg1[%c0, %c0_0] : memref<8x74xf32, #tpu.memory_space<vmem>>, vector<8x74xf32>
    %1 = arith.truncf %0 : vector<8x74xf32> to vector<8x74xbf16>
    %c0_1 = arith.constant 0 : index
    %c0_2 = arith.constant 0 : index
    %2 = vector.load %arg2[%c0_1, %c0_2] : memref<74x256xbf16, #tpu.memory_space<vmem>>, vector<74x256xbf16>
    %cst = arith.constant dense<0.000000e+00> : vector<8x256xf32>
    %3 = tpu.matmul %1, %2, %cst {dimension_numbers = #tpu.dot_dimension_numbers<[1], [0], [0], [1], [0, 0, 1, 1], [], []>} : vector<8x74xbf16>, vector<74x256xbf16>, vector<8x256xf32> -> vector<8x256xf32>
    %c0_3 = arith.constant 0 : index
    %c0_4 = arith.constant 0 : index
    %4 = vector.load %arg3[%c0_3, %c0_4] : memref<1x256xf32, #tpu.memory_space<vmem>>, vector<1x256xf32>
    %5 = vector.broadcast %4 : vector<1x256xf32> to vector<8x256xf32>
    %6 = arith.addf %3, %5 : vector<8x256xf32>
    %7 = math.tanh %6 : vector<8x256xf32>
    %8 = arith.truncf %7 : vector<8x256xf32> to vector<8x256xbf16>
    %c0_5 = arith.constant 0 : index
    %c0_6 = arith.constant 0 : index
    %9 = vector.load %arg4[%c0_5, %c0_6] : memref<256x256xbf16, #tpu.memory_space<vmem>>, vector<256x256xbf16>
    %cst_7 = arith.constant dense<0.000000e+00> : vector<8x256xf32>
    %10 = tpu.matmul %8, %9, %cst_7 {dimension_numbers = #tpu.dot_dimension_numbers<[1], [0], [0], [1], [0, 0, 1, 1], [], []>} : vector<8x256xbf16>, vector<256x256xbf16>, vector<8x256xf32> -> vector<8x256xf32>
    %c0_8 = arith.constant 0 : index
    %c0_9 = arith.constant 0 : index
    %11 = vector.load %arg5[%c0_8, %c0_9] : memref<1x256xf32, #tpu.memory_space<vmem>>, vector<1x256xf32>
    %12 = vector.broadcast %11 : vector<1x256xf32> to vector<8x256xf32>
    %13 = arith.addf %10, %12 : vector<8x256xf32>
    %14 = math.tanh %13 : vector<8x256xf32>
    %15 = arith.truncf %14 : vector<8x256xf32> to vector<8x256xbf16>
    %c0_10 = arith.constant 0 : index
    %c0_11 = arith.constant 0 : index
    %16 = vector.load %arg6[%c0_10, %c0_11] : memref<256x256xbf16, #tpu.memory_space<vmem>>, vector<256x256xbf16>
    %cst_12 = arith.constant dense<0.000000e+00> : vector<8x256xf32>
    %17 = tpu.matmul %15, %16, %cst_12 {dimension_numbers = #tpu.dot_dimension_numbers<[1], [0], [0], [1], [0, 0, 1, 1], [], []>} : vector<8x256xbf16>, vector<256x256xbf16>, vector<8x256xf32> -> vector<8x256xf32>
    %c0_13 = arith.constant 0 : index
    %c0_14 = arith.constant 0 : index
    %18 = vector.load %arg7[%c0_13, %c0_14] : memref<1x256xf32, #tpu.memory_space<vmem>>, vector<1x256xf32>
    %19 = vector.broadcast %18 : vector<1x256xf32> to vector<8x256xf32>
    %20 = arith.addf %17, %19 : vector<8x256xf32>
    %21 = math.tanh %20 : vector<8x256xf32>
    %22 = arith.truncf %21 : vector<8x256xf32> to vector<8x256xbf16>
    %c0_15 = arith.constant 0 : index
    %c0_16 = arith.constant 0 : index
    %23 = vector.load %arg8[%c0_15, %c0_16] : memref<256x256xbf16, #tpu.memory_space<vmem>>, vector<256x256xbf16>
    %cst_17 = arith.constant dense<0.000000e+00> : vector<8x256xf32>
    %24 = tpu.matmul %22, %23, %cst_17 {dimension_numbers = #tpu.dot_dimension_numbers<[1], [0], [0], [1], [0, 0, 1, 1], [], []>} : vector<8x256xbf16>, vector<256x256xbf16>, vector<8x256xf32> -> vector<8x256xf32>
    %c0_18 = arith.constant 0 : index
    %c0_19 = arith.constant 0 : index
    %25 = vector.load %arg9[%c0_18, %c0_19] : memref<1x256xf32, #tpu.memory_space<vmem>>, vector<1x256xf32>
    %26 = vector.broadcast %25 : vector<1x256xf32> to vector<8x256xf32>
    %27 = arith.addf %24, %26 : vector<8x256xf32>
    %28 = math.tanh %27 : vector<8x256xf32>
    %c0_20 = arith.constant 0 : index
    %c0_21 = arith.constant 0 : index
    %29 = vector.load %arg10[%c0_20, %c0_21] : memref<1x256xf32, #tpu.memory_space<vmem>>, vector<1x256xf32>
    %30 = vector.broadcast %29 : vector<1x256xf32> to vector<8x256xf32>
    %31 = arith.mulf %28, %30 : vector<8x256xf32>
    %cst_22 = arith.constant dense<0.000000e+00> : vector<8xf32>
    %32 = vector.multi_reduction <add>, %31, %cst_22 [1] : vector<8x256xf32> to vector<8xf32>
    %33 = vector.shape_cast %32 : vector<8xf32> to vector<8x1xf32>
    %c0_23 = arith.constant 0 : index
    %c0_24 = arith.constant 0 : index
    %34 = vector.load %arg11[%c0_23, %c0_24] : memref<1x1xf32, #tpu.memory_space<vmem>>, vector<1x1xf32>
    %35 = vector.broadcast %34 : vector<1x1xf32> to vector<8x1xf32>
    %36 = arith.addf %33, %35 : vector<8x1xf32>
    %c0_25 = arith.constant 0 : index
    %c0_26 = arith.constant 0 : index
    %37 = vector.load %arg12[%c0_25, %c0_26] : memref<8x1xf32, #tpu.memory_space<vmem>>, vector<8x1xf32>
    tpu.vector_store %arg12[%c0_25, %c0_26], %36 {strides = array<i32>} : memref<8x1xf32, #tpu.memory_space<vmem>>, vector<8x1xf32>,
    return
  }
  func.func @transform_0(%arg0: i32) -> (i32, i32) {
    %c0_i32 = arith.constant 0 : i32
    %c0_i32_0 = arith.constant 0 : i32
    return %arg0, %c0_i32 : i32, i32
  }
  func.func @transform_1(%arg0: i32) -> (i32, i32) {
    %c0_i32 = arith.constant 0 : i32
    %c0_i32_0 = arith.constant 0 : i32
    %c0_i32_1 = arith.constant 0 : i32
    return %c0_i32, %c0_i32_0 : i32, i32
  }
  func.func @transform_2(%arg0: i32) -> (i32, i32) {
    %c0_i32 = arith.constant 0 : i32
    %c0_i32_0 = arith.constant 0 : i32
    %c0_i32_1 = arith.constant 0 : i32
    return %c0_i32, %c0_i32_0 : i32, i32
  }
  func.func @transform_3(%arg0: i32) -> (i32, i32) {
    %c0_i32 = arith.constant 0 : i32
    %c0_i32_0 = arith.constant 0 : i32
    %c0_i32_1 = arith.constant 0 : i32
    return %c0_i32, %c0_i32_0 : i32, i32
  }
  func.func @transform_4(%arg0: i32) -> (i32, i32) {
    %c0_i32 = arith.constant 0 : i32
    %c0_i32_0 = arith.constant 0 : i32
    %c0_i32_1 = arith.constant 0 : i32
    return %c0_i32, %c0_i32_0 : i32, i32
  }
  func.func @transform_5(%arg0: i32) -> (i32, i32) {
    %c0_i32 = arith.constant 0 : i32
    %c0_i32_0 = arith.constant 0 : i32
    %c0_i32_1 = arith.constant 0 : i32
    return %c0_i32, %c0_i32_0 : i32, i32
  }
  func.func @transform_6(%arg0: i32) -> (i32, i32) {
    %c0_i32 = arith.constant 0 : i32
    %c0_i32_0 = arith.constant 0 : i32
    %c0_i32_1 = arith.constant 0 : i32
    return %c0_i32, %c0_i32_0 : i32, i32
  }
  func.func @transform_7(%arg0: i32) -> (i32, i32) {
    %c0_i32 = arith.constant 0 : i32
    %c0_i32_0 = arith.constant 0 : i32
    %c0_i32_1 = arith.constant 0 : i32
    return %c0_i32, %c0_i32_0 : i32, i32
  }
  func.func @transform_8(%arg0: i32) -> (i32, i32) {
    %c0_i32 = arith.constant 0 : i32
    %c0_i32_0 = arith.constant 0 : i32
    %c0_i32_1 = arith.constant 0 : i32
    return %c0_i32, %c0_i32_0 : i32, i32
  }
  func.func @transform_9(%arg0: i32) -> (i32, i32) {
    %c0_i32 = arith.constant 0 : i32
    %c0_i32_0 = arith.constant 0 : i32
    %c0_i32_1 = arith.constant 0 : i32
    return %c0_i32, %c0_i32_0 : i32, i32
  }
  func.func @transform_10(%arg0: i32) -> (i32, i32) {
    %c0_i32 = arith.constant 0 : i32
    %c0_i32_0 = arith.constant 0 : i32
    %c0_i32_1 = arith.constant 0 : i32
    return %c0_i32, %c0_i32_0 : i32, i32
  }
  func.func @transform_11(%arg0: i32) -> (i32, i32) {
    %c0_i32 = arith.constant 0 : i32
    %c0_i32_0 = arith.constant 0 : i32
    return %arg0, %c0_i32 : i32, i32
  }
}

</mosaic_0001>

<llo_original>
// kernel: tpu_custom_call.1
$region0: #{tpu_custom_call.1}
  #allocation0 [shape = 'u32[]', space=smem, size = 0x4, offset = 0x4, fixed_abs, tag = 'smem constant byte address 0x4 - core index']
  #allocation1 [shape = 'u32[144,128]{1,0:T(1,128)}', space=vmem, size = 0x12000, scoped, tag = 'internal scratch']
  #allocation2 [shape = 'f32[1,1]{1,0:T(1,128)S(1)}', space=vmem, size = 0x200, scoped, tag = 'scoped memory for tpu_custom_call.1']
  %s0 = inlined_call_operand.hbm [shape: f32[8,74], index: 0, kind: input, shape index: {}]
  %s1 = inlined_call_operand.hbm [shape: bf16[74,256], index: 1, kind: input, shape index: {}]
  %s2 = inlined_call_operand.vmem [shape: f32[1,256], index: 2, kind: input, shape index: {}]
  %s3 = inlined_call_operand.hbm [shape: bf16[256,256], index: 3, kind: input, shape index: {}]
  %s4 = inlined_call_operand.vmem [shape: f32[1,256], index: 4, kind: input, shape index: {}]
  %s5 = inlined_call_operand.hbm [shape: bf16[256,256], index: 5, kind: input, shape index: {}]
  %s6 = inlined_call_operand.vmem [shape: f32[1,256], index: 6, kind: input, shape index: {}]
  %s7 = inlined_call_operand.hbm [shape: bf16[256,256], index: 7, kind: input, shape index: {}]
  %s8 = inlined_call_operand.vmem [shape: f32[1,256], index: 8, kind: input, shape index: {}]
  %s9 = inlined_call_operand.vmem [shape: f32[1,256], index: 9, kind: input, shape index: {}]
  %s10 = inlined_call_operand.<no memory space> [shape: f32[1,1], index: 10, kind: input, shape index: {}]
  %s11 = inlined_call_operand.vmem [shape: f32[8,1], index: 11, kind: output, shape index: {}]
  %s12 = sld [smem:[#allocation0]]
  $region74: #{tpu_custom_call.1} parent=0
    _
  %s14 = ssub.s32 1, %s12
  %s15 = scalar_select 0, %s14, %s12
  %v16 = vstv %s10
  %17 = vst [vmem:[#allocation2] sm:$0x1] %v16
  $region1: #{tpu_custom_call.1} parent=0
    #allocation3 [shape = 'u8[4096]{0}', space=vmem, size = 0x1000, scoped, tag = 'input window, operand 0, single buffered']
    #allocation4 [shape = 's32[1]{0}', space=sflag, size = 0x4, scoped, tag = 'scoped memory for tpu_custom_call.1']
    #allocation5 [shape = 'u8[40960]{0}', space=vmem, size = 0xa000, scoped, tag = 'input window, operand 1, single buffered']
    #allocation6 [shape = 's32[1]{0}', space=sflag, size = 0x4, scoped, tag = 'scoped memory for tpu_custom_call.1']
    #allocation7 [shape = 'u8[131072]{0}', space=vmem, size = 0x20000, scoped, tag = 'input window, operand 3, single buffered']
    #allocation8 [shape = 'u8[131072]{0}', space=vmem, size = 0x20000, scoped, tag = 'input window, operand 5, single buffered']
    #allocation9 [shape = 's32[1]{0}', space=sflag, size = 0x4, scoped, tag = 'scoped memory for tpu_custom_call.1']
    #allocation10 [shape = 'u8[131072]{0}', space=vmem, size = 0x20000, scoped, tag = 'input window, operand 7, single buffered']
    %18 = vsyncpa [#allocation4], 0
    %19 = vsyncpa [#allocation6], 0
    %20 = vsyncpa [#allocation9], 0
    // Predicated region
    $region2: #{tpu_custom_call.1} parent=1 // pred_check
      _
    $region3: #{tpu_custom_call.1} parent=1 // pred_check_branch
      %22 = sbr.rel (0) target = $region5
    $region4: #{tpu_custom_call.1} parent=1 // pred_region
      %s24 = ssub.s32 128, 128
      %25 = vsyncadd [#allocation4], %s24
      %s27 = sshll.u32 [#allocation3], 4
      %s28 = int_to_ptr.vmem [resolvable:$true] %s27
      %30 = dma.hbm_to_vmem [thread:$0]  %s0, 128, %s28, [#allocation4]
    $region5: #{tpu_custom_call.1} parent=1 // pred_fallthru
      _
    // Predicated region
    $region6: #{tpu_custom_call.1} parent=1 // pred_check
      _
    $region7: #{tpu_custom_call.1} parent=1 // pred_check_branch
      %32 = sbr.rel (0) target = $region9
    $region8: #{tpu_custom_call.1} parent=1 // pred_region
      %s34 = ssub.s32 1280, 1280
      %35 = vsyncadd [#allocation6], %s34
      %s36 = sshll.u32 [#allocation5], 4
      %s37 = int_to_ptr.vmem [resolvable:$true] %s36
      %42 = dma.hbm_to_vmem [thread:$0]  %s1, 1280, %s37, [#allocation6], 128, 128, 8
    $region9: #{tpu_custom_call.1} parent=1 // pred_fallthru
      _
    // Predicated region
    $region10: #{tpu_custom_call.1} parent=1 // pred_check
      _
    $region11: #{tpu_custom_call.1} parent=1 // pred_check_branch
      %44 = sbr.rel (0) target = $region13
    $region12: #{tpu_custom_call.1} parent=1 // pred_region
      _
    $region13: #{tpu_custom_call.1} parent=1 // pred_fallthru
      _
    // Predicated region
    $region14: #{tpu_custom_call.1} parent=1 // pred_check
      _
    $region15: #{tpu_custom_call.1} parent=1 // pred_check_branch
      %46 = sbr.rel (0) target = $region17
    $region16: #{tpu_custom_call.1} parent=1 // pred_region
      %s48 = ssub.s32 4096, 4096
      %49 = vsyncadd [#allocation6], %s48
      %s50 = sshll.u32 [#allocation7], 4
      %s51 = int_to_ptr.vmem [resolvable:$true] %s50
      %56 = dma.hbm_to_vmem [thread:$0]  %s3, 4096, %s51, [#allocation6], 128, 128, 8
    $region17: #{tpu_custom_call.1} parent=1 // pred_fallthru
      _
    // Predicated region
    $region18: #{tpu_custom_call.1} parent=1 // pred_check
      _
    $region19: #{tpu_custom_call.1} parent=1 // pred_check_branch
      %58 = sbr.rel (0) target = $region21
    $region20: #{tpu_custom_call.1} parent=1 // pred_region
      _
    $region21: #{tpu_custom_call.1} parent=1 // pred_fallthru
      _
    // Predicated region
    $region22: #{tpu_custom_call.1} parent=1 // pred_check
      _
    $region23: #{tpu_custom_call.1} parent=1 // pred_check_branch
      %60 = sbr.rel (0) target = $region25
    $region24: #{tpu_custom_call.1} parent=1 // pred_region
      %s62 = ssub.s32 4096, 4096
      %63 = vsyncadd [#allocation9], %s62
      %s64 = sshll.u32 [#allocation8], 4
      %s65 = int_to_ptr.vmem [resolvable:$true] %s64
      %70 = dma.hbm_to_vmem [thread:$0]  %s5, 4096, %s65, [#allocation9], 128, 128, 8
    $region25: #{tpu_custom_call.1} parent=1 // pred_fallthru
      _
    // Predicated region
    $region26: #{tpu_custom_call.1} parent=1 // pred_check
      _
    $region27: #{tpu_custom_call.1} parent=1 // pred_check_branch
      %72 = sbr.rel (0) target = $region29
    $region28: #{tpu_custom_call.1} parent=1 // pred_region
      _
    $region29: #{tpu_custom_call.1} parent=1 // pred_fallthru
      _
    // Predicated region
    $region30: #{tpu_custom_call.1} parent=1 // pred_check
      _
    $region31: #{tpu_custom_call.1} parent=1 // pred_check_branch
      %74 = sbr.rel (0) target = $region33
    $region32: #{tpu_custom_call.1} parent=1 // pred_region
      %s76 = ssub.s32 4096, 4096
      %77 = vsyncadd [#allocation9], %s76
      %s78 = sshll.u32 [#allocation10], 4
      %s79 = int_to_ptr.vmem [resolvable:$true] %s78
      %84 = dma.hbm_to_vmem [thread:$0]  %s7, 4096, %s79, [#allocation9], 128, 128, 8
    $region33: #{tpu_custom_call.1} parent=1 // pred_fallthru
      _
    // Predicated region
    $region34: #{tpu_custom_call.1} parent=1 // pred_check
      _
    $region35: #{tpu_custom_call.1} parent=1 // pred_check_branch
      %86 = sbr.rel (0) target = $region37
    $region36: #{tpu_custom_call.1} parent=1 // pred_region
      _
    $region37: #{tpu_custom_call.1} parent=1 // pred_fallthru
      _
    // Predicated region
    $region38: #{tpu_custom_call.1} parent=1 // pred_check
      _
    $region39: #{tpu_custom_call.1} parent=1 // pred_check_branch
      %88 = sbr.rel (0) target = $region41
    $region40: #{tpu_custom_call.1} parent=1 // pred_region
      _
    $region41: #{tpu_custom_call.1} parent=1 // pred_fallthru
      _
    // Predicated region
    $region42: #{tpu_custom_call.1} parent=1 // pred_check
      _
    $region43: #{tpu_custom_call.1} parent=1 // pred_check_branch
      %90 = sbr.rel (0) target = $region45
    $region44: #{tpu_custom_call.1} parent=1 // pred_region
      _
    $region45: #{tpu_custom_call.1} parent=1 // pred_fallthru
      _
    // Predicated region
    $region46: #{tpu_custom_call.1} parent=1 // pred_check
      _
    $region47: #{tpu_custom_call.1} parent=1 // pred_check_branch
      %92 = sbr.rel (0) target = $region49
    $region48: #{tpu_custom_call.1} parent=1 // pred_region
      %93 = dma.done [#allocation4], 128
    $region49: #{tpu_custom_call.1} parent=1 // pred_fallthru
      _
    // Predicated region
    $region50: #{tpu_custom_call.1} parent=1 // pred_check
      _
    $region51: #{tpu_custom_call.1} parent=1 // pred_check_branch
      %95 = sbr.rel (0) target = $region53
    $region52: #{tpu_custom_call.1} parent=1 // pred_region
      %96 = dma.done [#allocation6], 1280
    $region53: #{tpu_custom_call.1} parent=1 // pred_fallthru
      _
    // Predicated region
    $region54: #{tpu_custom_call.1} parent=1 // pred_check
      _
    $region55: #{tpu_custom_call.1} parent=1 // pred_check_branch
      %98 = sbr.rel (0) target = $region57
    $region56: #{tpu_custom_call.1} parent=1 // pred_region
      %99 = dma.done [#allocation6], 4096
    $region57: #{tpu_custom_call.1} parent=1 // pred_fallthru
      _
    // Predicated region
    $region58: #{tpu_custom_call.1} parent=1 // pred_check
      _
    $region59: #{tpu_custom_call.1} parent=1 // pred_check_branch
      %101 = sbr.rel (0) target = $region61
    $region60: #{tpu_custom_call.1} parent=1 // pred_region
      %102 = dma.done [#allocation9], 4096
    $region61: #{tpu_custom_call.1} parent=1 // pred_fallthru
      _
    // Predicated region
    $region62: #{tpu_custom_call.1} parent=1 // pred_check
      _
    $region63: #{tpu_custom_call.1} parent=1 // pred_check_branch
      %104 = sbr.rel (0) target = $region65
    $region64: #{tpu_custom_call.1} parent=1 // pred_region
      %105 = dma.done [#allocation9], 4096
    $region65: #{tpu_custom_call.1} parent=1 // pred_fallthru
      _
    %v107 = vld [vmem:[#allocation3] sm:$0xff]
    %v108 = vpack.c.bf16 %v107, %v107
    %v109 = vld [vmem:[#allocation5] sm:$0xff]
    %v110 = vld [vmem:[#allocation5 + $0x8] sm:$0xff]
    %v111 = vld [vmem:[#allocation5 + $0x10] sm:$0xff]
    %v112 = vld [vmem:[#allocation5 + $0x18] sm:$0xff]
    %v113 = vld [vmem:[#allocation5 + $0x20] sm:$0xff]
    %v114 = vld [vmem:[#allocation5 + $0x28] sm:$0xff]
    %v115 = vld [vmem:[#allocation5 + $0x30] sm:$0xff]
    %v116 = vld [vmem:[#allocation5 + $0x38] sm:$0xff]
    %v117 = vld [vmem:[#allocation5 + $0x40] sm:$0xff]
    %v118 = vld [vmem:[#allocation5 + $0x48] sm:$0x11]
    %v119 = vld [vmem:[%s2] sm:$0x3]
    %v121 = vlaneseq
    %v122 = vshrl.u32 %v121, 7
    %v123 = vsub.s32 0, %v122
    %v124 = vrot.slane %v119, %v123
    %v125 = vlaneseq
    %v126 = vshrl.u32 %v125, 7
    %v127 = vsub.s32 1, %v126
    %v128 = vrot.slane %v119, %v127
    %v141 = vunpack.c.l.b16 %v109
    %v142 = vunpack.c.h.b16 %v109
    %v143 = vunpack.c.l.b16 %v110
    %v144 = vunpack.c.h.b16 %v110
    %v145 = vunpack.c.l.b16 %v111
    %v146 = vunpack.c.h.b16 %v111
    %v147 = vunpack.c.l.b16 %v112
    %v148 = vunpack.c.h.b16 %v112
    %v149 = vunpack.c.l.b16 %v113
    %v150 = vunpack.c.h.b16 %v113
    %v151 = vunpack.c.l.b16 %v114
    %v152 = vunpack.c.h.b16 %v114
    %v153 = vunpack.c.l.b16 %v115
    %v154 = vunpack.c.h.b16 %v115
    %v155 = vunpack.c.l.b16 %v116
    %v156 = vunpack.c.h.b16 %v116
    %v157 = vunpack.c.l.b16 %v117
    %v158 = vunpack.c.h.b16 %v117
    %v159 = vunpack.c.l.b16 %v118
    %v160 = vunpack.c.h.b16 %v118
    %v161 = vpack.c.b16 %v143, %v141
    %v162 = vpack.c.b16 %v144, %v142
    %v163 = vpack.c.b16 %v147, %v145
    %v164 = vpack.c.b16 %v148, %v146
    %v165 = vpack.c.b16 %v151, %v149
    %v166 = vpack.c.b16 %v152, %v150
    %v167 = vpack.c.b16 %v155, %v153
    %v168 = vpack.c.b16 %v156, %v154
    %v169 = vpack.c.b16 %v159, %v157
    %v170 = vpack.c.b16 %v160, %v158
    %vm179 = vcmask 605184
    %v181 = vsel %vm179, %v108, 0
    %vm183 = vcmask 1044480
    %v185 = vsel %vm183, %v169, 0
    %v188 = vsel %vm183, %v170, 0
    %190 = vmatprep.subr.bf16.mxu0 %v162
    %191 = vmatpush1.bf16.msra.mxu0 %v161
    %192 = vmatprep.subr.bf16.mxu0 %v164
    %193 = vmatpush1.bf16.msra.mxu0 %v163
    %194 = vmatprep.subr.bf16.mxu0 %v166
    %195 = vmatpush1.bf16.msra.mxu0 %v165
    %196 = vmatprep.subr.bf16.mxu0 %v168
    %197 = vmatpush1.bf16.msra.mxu0 %v167
    %198 = vmatprep.subr.bf16.mxu0 %v188
    %199 = vmatpush1.bf16.msra.mxu0 %v185
    %200 = vmatprep.subr.bf16.mxu0 0
    %201 = vmatpush1.bf16.msra.mxu0 0
    %202 = vmatprep.subr.bf16.mxu0 0
    %203 = vmatpush1.bf16.msra.mxu0 0
    %204 = vmatprep.subr.bf16.mxu0 0
    %205 = vmatpush1.bf16.msra.mxu0 0
    %206 = vmatprep.subr.bf16.mxu0 0
    %207 = vmatpush1.bf16.msra.mxu0 0
    %208 = vmatprep.subr.bf16.mxu0 0
    %209 = vmatpush1.bf16.msra.mxu0 0
    %210 = vmatprep.subr.bf16.mxu0 0
    %211 = vmatpush1.bf16.msra.mxu0 0
    %212 = vmatprep.subr.bf16.mxu0 0
    %213 = vmatpush1.bf16.msra.mxu0 0
    %214 = vmatprep.subr.bf16.mxu0 0
    %215 = vmatpush1.bf16.msra.mxu0 0
    %216 = vmatprep.subr.bf16.mxu0 0
    %217 = vmatpush1.bf16.msra.mxu0 0
    %218 = vmatprep.subr.bf16.mxu0 0
    %219 = vmatpush1.bf16.msra.mxu0 0
    %220 = vmatprep.subr.bf16.mxu0 0
    %221 = vmatpush1.bf16.msra.mxu0 0
    %222 = vmatprep.mubr.bf16.mxu0 0
    %223 = vmatmul.mubr.bf16.gmra.mrb[0].mxu0 %v181
    %v224 = vpop.f32.mrb[0].mxu0
    %v225 = vadd.f32 %v124, %v224
    %v226 = vpop.f32.mrb[0].mxu0
    %v227 = vadd.f32 %v128, %v226
    %v228 = vpop.f32.mrb[0].mxu0
    %v229 = vpop.f32.mrb[0].mxu0
    %230 = vdwg.mxu0
    %v231 = vtanh.pop %v225
    %v232 = vtanh.pop %v227
    %v233 = vpack.c.bf16 %v231, %v231
    %v234 = vpack.c.bf16 %v232, %v232
    %v235 = vld [vmem:[#allocation7] sm:$0xff]
    %v236 = vld [vmem:[#allocation7 + $0x8] sm:$0xff]
    %v237 = vld [vmem:[#allocation7 + $0x10] sm:$0xff]
    %v238 = vld [vmem:[#allocation7 + $0x18] sm:$0xff]
    %v239 = vld [vmem:[#allocation7 + $0x20] sm:$0xff]
    %v240 = vld [vmem:[#allocation7 + $0x28] sm:$0xff]
    %v241 = vld [vmem:[#allocation7 + $0x30] sm:$0xff]
    %v242 = vld [vmem:[#allocation7 + $0x38] sm:$0xff]
    %v243 = vld [vmem:[#allocation7 + $0x40] sm:$0xff]
    %v244 = vld [vmem:[#allocation7 + $0x48] sm:$0xff]
    %v245 = vld [vmem:[#allocation7 + $0x50] sm:$0xff]
    %v246 = vld [vmem:[#allocation7 + $0x58] sm:$0xff]
    %v247 = vld [vmem:[#allocation7 + $0x60] sm:$0xff]
    %v248 = vld [vmem:[#allocation7 + $0x68] sm:$0xff]
    %v249 = vld [vmem:[#allocation7 + $0x70] sm:$0xff]
    %v250 = vld [vmem:[#allocation7 + $0x78] sm:$0xff]
    %v251 = vld [vmem:[#allocation7 + $0x80] sm:$0xff]
    %v252 = vld [vmem:[#allocation7 + $0x88] sm:$0xff]
    %v253 = vld [vmem:[#allocation7 + $0x90] sm:$0xff]
    %v254 = vld [vmem:[#allocation7 + $0x98] sm:$0xff]
    %v255 = vld [vmem:[#allocation7 + $0xa0] sm:$0xff]
    %v256 = vld [vmem:[#allocation7 + $0xa8] sm:$0xff]
    %v257 = vld [vmem:[#allocation7 + $0xb0] sm:$0xff]
    %v258 = vld [vmem:[#allocation7 + $0xb8] sm:$0xff]
    %v259 = vld [vmem:[#allocation7 + $0xc0] sm:$0xff]
    %v260 = vld [vmem:[#allocation7 + $0xc8] sm:$0xff]
    %v261 = vld [vmem:[#allocation7 + $0xd0] sm:$0xff]
    %v262 = vld [vmem:[#allocation7 + $0xd8] sm:$0xff]
    %v263 = vld [vmem:[#allocation7 + $0xe0] sm:$0xff]
    %v264 = vld [vmem:[#allocation7 + $0xe8] sm:$0xff]
    %v265 = vld [vmem:[#allocation7 + $0xf0] sm:$0xff]
    %v266 = vld [vmem:[#allocation7 + $0xf8] sm:$0xff]
    %v267 = vld [vmem:[%s4] sm:$0x3]
    %v269 = vlaneseq
    %v270 = vshrl.u32 %v269, 7
    %v271 = vsub.s32 0, %v270
    %v272 = vrot.slane %v267, %v271
    %v273 = vlaneseq
    %v274 = vshrl.u32 %v273, 7
    %v275 = vsub.s32 1, %v274
    %v276 = vrot.slane %v267, %v275
    %v311 = vunpack.c.l.b16 %v235
    %v312 = vunpack.c.h.b16 %v235
    %v313 = vunpack.c.l.b16 %v236
    %v314 = vunpack.c.h.b16 %v236
    %v315 = vunpack.c.l.b16 %v237
    %v316 = vunpack.c.h.b16 %v237
    %v317 = vunpack.c.l.b16 %v238
    %v318 = vunpack.c.h.b16 %v238
    %v319 = vunpack.c.l.b16 %v239
    %v320 = vunpack.c.h.b16 %v239
    %v321 = vunpack.c.l.b16 %v240
    %v322 = vunpack.c.h.b16 %v240
    %v323 = vunpack.c.l.b16 %v241
    %v324 = vunpack.c.h.b16 %v241
    %v325 = vunpack.c.l.b16 %v242
    %v326 = vunpack.c.h.b16 %v242
    %v327 = vunpack.c.l.b16 %v243
    %v328 = vunpack.c.h.b16 %v243
    %v329 = vunpack.c.l.b16 %v244
    %v330 = vunpack.c.h.b16 %v244
    %v331 = vunpack.c.l.b16 %v245
    %v332 = vunpack.c.h.b16 %v245
    %v333 = vunpack.c.l.b16 %v246
    %v334 = vunpack.c.h.b16 %v246
    %v335 = vunpack.c.l.b16 %v247
    %v336 = vunpack.c.h.b16 %v247
    %v337 = vunpack.c.l.b16 %v248
    %v338 = vunpack.c.h.b16 %v248
    %v339 = vunpack.c.l.b16 %v249
    %v340 = vunpack.c.h.b16 %v249
    %v341 = vunpack.c.l.b16 %v250
    %v342 = vunpack.c.h.b16 %v250
    %v343 = vunpack.c.l.b16 %v251
    %v344 = vunpack.c.h.b16 %v251
    %v345 = vunpack.c.l.b16 %v252
    %v346 = vunpack.c.h.b16 %v252
    %v347 = vunpack.c.l.b16 %v253
    %v348 = vunpack.c.h.b16 %v253
    %v349 = vunpack.c.l.b16 %v254
    %v350 = vunpack.c.h.b16 %v254
    %v351 = vunpack.c.l.b16 %v255
    %v352 = vunpack.c.h.b16 %v255
    %v353 = vunpack.c.l.b16 %v256
    %v354 = vunpack.c.h.b16 %v256
    %v355 = vunpack.c.l.b16 %v257
    %v356 = vunpack.c.h.b16 %v257
    %v357 = vunpack.c.l.b16 %v258
    %v358 = vunpack.c.h.b16 %v258
    %v359 = vunpack.c.l.b16 %v259
    %v360 = vunpack.c.h.b16 %v259
    %v361 = vunpack.c.l.b16 %v260
    %v362 = vunpack.c.h.b16 %v260
    %v363 = vunpack.c.l.b16 %v261
    %v364 = vunpack.c.h.b16 %v261
    %v365 = vunpack.c.l.b16 %v262
    %v366 = vunpack.c.h.b16 %v262
    %v367 = vunpack.c.l.b16 %v263
    %v368 = vunpack.c.h.b16 %v263
    %v369 = vunpack.c.l.b16 %v264
    %v370 = vunpack.c.h.b16 %v264
    %v371 = vunpack.c.l.b16 %v265
    %v372 = vunpack.c.h.b16 %v265
    %v373 = vunpack.c.l.b16 %v266
    %v374 = vunpack.c.h.b16 %v266
    %v375 = vpack.c.b16 %v313, %v311
    %v376 = vpack.c.b16 %v314, %v312
    %v377 = vpack.c.b16 %v317, %v315
    %v378 = vpack.c.b16 %v318, %v316
    %v379 = vpack.c.b16 %v321, %v319
    %v380 = vpack.c.b16 %v322, %v320
    %v381 = vpack.c.b16 %v325, %v323
    %v382 = vpack.c.b16 %v326, %v324
    %v383 = vpack.c.b16 %v329, %v327
    %v384 = vpack.c.b16 %v330, %v328
    %v385 = vpack.c.b16 %v333, %v331
    %v386 = vpack.c.b16 %v334, %v332
    %v387 = vpack.c.b16 %v337, %v335
    %v388 = vpack.c.b16 %v338, %v336
    %v389 = vpack.c.b16 %v341, %v339
    %v390 = vpack.c.b16 %v342, %v340
    %v391 = vpack.c.b16 %v345, %v343
    %v392 = vpack.c.b16 %v346, %v344
    %v393 = vpack.c.b16 %v349, %v347
    %v394 = vpack.c.b16 %v350, %v348
    %v395 = vpack.c.b16 %v353, %v351
    %v396 = vpack.c.b16 %v354, %v352
    %v397 = vpack.c.b16 %v357, %v355
    %v398 = vpack.c.b16 %v358, %v356
    %v399 = vpack.c.b16 %v361, %v359
    %v400 = vpack.c.b16 %v362, %v360
    %v401 = vpack.c.b16 %v365, %v363
    %v402 = vpack.c.b16 %v366, %v364
    %v403 = vpack.c.b16 %v369, %v367
    %v404 = vpack.c.b16 %v370, %v368
    %v405 = vpack.c.b16 %v373, %v371
    %v406 = vpack.c.b16 %v374, %v372
    %439 = vmatprep.subr.bf16.mxu0 %v376
    %440 = vmatpush1.bf16.msra.mxu0 %v375
    %441 = vmatprep.subr.bf16.mxu0 %v378
    %442 = vmatpush1.bf16.msra.mxu0 %v377
    %443 = vmatprep.subr.bf16.mxu0 %v380
    %444 = vmatpush1.bf16.msra.mxu0 %v379
    %445 = vmatprep.subr.bf16.mxu0 %v382
    %446 = vmatpush1.bf16.msra.mxu0 %v381
    %447 = vmatprep.subr.bf16.mxu0 %v384
    %448 = vmatpush1.bf16.msra.mxu0 %v383
    %449 = vmatprep.subr.bf16.mxu0 %v386
    %450 = vmatpush1.bf16.msra.mxu0 %v385
    %451 = vmatprep.subr.bf16.mxu0 %v388
    %452 = vmatpush1.bf16.msra.mxu0 %v387
    %453 = vmatprep.subr.bf16.mxu0 %v390
    %454 = vmatpush1.bf16.msra.mxu0 %v389
    %455 = vmatprep.subr.bf16.mxu0 %v392
    %456 = vmatpush1.bf16.msra.mxu0 %v391
    %457 = vmatprep.subr.bf16.mxu0 %v394
    %458 = vmatpush1.bf16.msra.mxu0 %v393
    %459 = vmatprep.subr.bf16.mxu0 %v396
    %460 = vmatpush1.bf16.msra.mxu0 %v395
    %461 = vmatprep.subr.bf16.mxu0 %v398
    %462 = vmatpush1.bf16.msra.mxu0 %v397
    %463 = vmatprep.subr.bf16.mxu0 %v400
    %464 = vmatpush1.bf16.msra.mxu0 %v399
    %465 = vmatprep.subr.bf16.mxu0 %v402
    %466 = vmatpush1.bf16.msra.mxu0 %v401
    %467 = vmatprep.subr.bf16.mxu0 %v404
    %468 = vmatpush1.bf16.msra.mxu0 %v403
    %469 = vmatprep.subr.bf16.mxu0 %v406
    %470 = vmatpush1.bf16.msra.mxu0 %v405
    %471 = vmatprep.mubr.bf16.mxu0 %v234
    %472 = vmatmul.mubr.bf16.gmra.mrb[0].mxu0 %v233
    %v473 = vpop.f32.mrb[0].mxu0
    %v474 = vadd.f32 %v272, %v473
    %v475 = vpop.f32.mrb[0].mxu0
    %v476 = vadd.f32 %v276, %v475
    %v477 = vpop.f32.mrb[0].mxu0
    %v478 = vpop.f32.mrb[0].mxu0
    %479 = vdwg.mxu0
    %v480 = vtanh.pop %v474
    %v481 = vtanh.pop %v476
    %v482 = vpack.c.bf16 %v480, %v480
    %v483 = vpack.c.bf16 %v481, %v481
    %v484 = vld [vmem:[#allocation8] sm:$0xff]
    %v485 = vld [vmem:[#allocation8 + $0x8] sm:$0xff]
    %v486 = vld [vmem:[#allocation8 + $0x10] sm:$0xff]
    %v487 = vld [vmem:[#allocation8 + $0x18] sm:$0xff]
    %v488 = vld [vmem:[#allocation8 + $0x20] sm:$0xff]
    %v489 = vld [vmem:[#allocation8 + $0x28] sm:$0xff]
    %v490 = vld [vmem:[#allocation8 + $0x30] sm:$0xff]
    %v491 = vld [vmem:[#allocation8 + $0x38] sm:$0xff]
    %v492 = vld [vmem:[#allocation8 + $0x40] sm:$0xff]
    %v493 = vld [vmem:[#allocation8 + $0x48] sm:$0xff]
    %v494 = vld [vmem:[#allocation8 + $0x50] sm:$0xff]
    %v495 = vld [vmem:[#allocation8 + $0x58] sm:$0xff]
    %v496 = vld [vmem:[#allocation8 + $0x60] sm:$0xff]
    %v497 = vld [vmem:[#allocation8 + $0x68] sm:$0xff]
    %v498 = vld [vmem:[#allocation8 + $0x70] sm:$0xff]
    %v499 = vld [vmem:[#allocation8 + $0x78] sm:$0xff]
    %v500 = vld [vmem:[#allocation8 + $0x80] sm:$0xff]
    %v501 = vld [vmem:[#allocation8 + $0x88] sm:$0xff]
    %v502 = vld [vmem:[#allocation8 + $0x90] sm:$0xff]
    %v503 = vld [vmem:[#allocation8 + $0x98] sm:$0xff]
    %v504 = vld [vmem:[#allocation8 + $0xa0] sm:$0xff]
    %v505 = vld [vmem:[#allocation8 + $0xa8] sm:$0xff]
    %v506 = vld [vmem:[#allocation8 + $0xb0] sm:$0xff]
    %v507 = vld [vmem:[#allocation8 + $0xb8] sm:$0xff]
    %v508 = vld [vmem:[#allocation8 + $0xc0] sm:$0xff]
    %v509 = vld [vmem:[#allocation8 + $0xc8] sm:$0xff]
    %v510 = vld [vmem:[#allocation8 + $0xd0] sm:$0xff]
    %v511 = vld [vmem:[#allocation8 + $0xd8] sm:$0xff]
    %v512 = vld [vmem:[#allocation8 + $0xe0] sm:$0xff]
    %v513 = vld [vmem:[#allocation8 + $0xe8] sm:$0xff]
    %v514 = vld [vmem:[#allocation8 + $0xf0] sm:$0xff]
    %v515 = vld [vmem:[#allocation8 + $0xf8] sm:$0xff]
    %v516 = vld [vmem:[%s6] sm:$0x3]
    %v518 = vlaneseq
    %v519 = vshrl.u32 %v518, 7
    %v520 = vsub.s32 0, %v519
    %v521 = vrot.slane %v516, %v520
    %v522 = vlaneseq
    %v523 = vshrl.u32 %v522, 7
    %v524 = vsub.s32 1, %v523
    %v525 = vrot.slane %v516, %v524
    %v560 = vunpack.c.l.b16 %v484
    %v561 = vunpack.c.h.b16 %v484
    %v562 = vunpack.c.l.b16 %v485
    %v563 = vunpack.c.h.b16 %v485
    %v564 = vunpack.c.l.b16 %v486
    %v565 = vunpack.c.h.b16 %v486
    %v566 = vunpack.c.l.b16 %v487
    %v567 = vunpack.c.h.b16 %v487
    %v568 = vunpack.c.l.b16 %v488
    %v569 = vunpack.c.h.b16 %v488
    %v570 = vunpack.c.l.b16 %v489
    %v571 = vunpack.c.h.b16 %v489
    %v572 = vunpack.c.l.b16 %v490
    %v573 = vunpack.c.h.b16 %v490
    %v574 = vunpack.c.l.b16 %v491
    %v575 = vunpack.c.h.b16 %v491
    %v576 = vunpack.c.l.b16 %v492
    %v577 = vunpack.c.h.b16 %v492
    %v578 = vunpack.c.l.b16 %v493
    %v579 = vunpack.c.h.b16 %v493
    %v580 = vunpack.c.l.b16 %v494
    %v581 = vunpack.c.h.b16 %v494
    %v582 = vunpack.c.l.b16 %v495
    %v583 = vunpack.c.h.b16 %v495
    %v584 = vunpack.c.l.b16 %v496
    %v585 = vunpack.c.h.b16 %v496
    %v586 = vunpack.c.l.b16 %v497
    %v587 = vunpack.c.h.b16 %v497
    %v588 = vunpack.c.l.b16 %v498
    %v589 = vunpack.c.h.b16 %v498
    %v590 = vunpack.c.l.b16 %v499
    %v591 = vunpack.c.h.b16 %v499
    %v592 = vunpack.c.l.b16 %v500
    %v593 = vunpack.c.h.b16 %v500
    %v594 = vunpack.c.l.b16 %v501
    %v595 = vunpack.c.h.b16 %v501
    %v596 = vunpack.c.l.b16 %v502
    %v597 = vunpack.c.h.b16 %v502
    %v598 = vunpack.c.l.b16 %v503
    %v599 = vunpack.c.h.b16 %v503
    %v600 = vunpack.c.l.b16 %v504
    %v601 = vunpack.c.h.b16 %v504
    %v602 = vunpack.c.l.b16 %v505
    %v603 = vunpack.c.h.b16 %v505
    %v604 = vunpack.c.l.b16 %v506
    %v605 = vunpack.c.h.b16 %v506
    %v606 = vunpack.c.l.b16 %v507
    %v607 = vunpack.c.h.b16 %v507
    %v608 = vunpack.c.l.b16 %v508
    %v609 = vunpack.c.h.b16 %v508
    %v610 = vunpack.c.l.b16 %v509
    %v611 = vunpack.c.h.b16 %v509
    %v612 = vunpack.c.l.b16 %v510
    %v613 = vunpack.c.h.b16 %v510
    %v614 = vunpack.c.l.b16 %v511
    %v615 = vunpack.c.h.b16 %v511
    %v616 = vunpack.c.l.b16 %v512
    %v617 = vunpack.c.h.b16 %v512
    %v618 = vunpack.c.l.b16 %v513
    %v619 = vunpack.c.h.b16 %v513
    %v620 = vunpack.c.l.b16 %v514
    %v621 = vunpack.c.h.b16 %v514
    %v622 = vunpack.c.l.b16 %v515
    %v623 = vunpack.c.h.b16 %v515
    %v624 = vpack.c.b16 %v562, %v560
    %v625 = vpack.c.b16 %v563, %v561
    %v626 = vpack.c.b16 %v566, %v564
    %v627 = vpack.c.b16 %v567, %v565
    %v628 = vpack.c.b16 %v570, %v568
    %v629 = vpack.c.b16 %v571, %v569
    %v630 = vpack.c.b16 %v574, %v572
    %v631 = vpack.c.b16 %v575, %v573
    %v632 = vpack.c.b16 %v578, %v576
    %v633 = vpack.c.b16 %v579, %v577
    %v634 = vpack.c.b16 %v582, %v580
    %v635 = vpack.c.b16 %v583, %v581
    %v636 = vpack.c.b16 %v586, %v584
    %v637 = vpack.c.b16 %v587, %v585
    %v638 = vpack.c.b16 %v590, %v588
    %v639 = vpack.c.b16 %v591, %v589
    %v640 = vpack.c.b16 %v594, %v592
    %v641 = vpack.c.b16 %v595, %v593
    %v642 = vpack.c.b16 %v598, %v596
    %v643 = vpack.c.b16 %v599, %v597
    %v644 = vpack.c.b16 %v602, %v600
    %v645 = vpack.c.b16 %v603, %v601
    %v646 = vpack.c.b16 %v606, %v604
    %v647 = vpack.c.b16 %v607, %v605
    %v648 = vpack.c.b16 %v610, %v608
    %v649 = vpack.c.b16 %v611, %v609
    %v650 = vpack.c.b16 %v614, %v612
    %v651 = vpack.c.b16 %v615, %v613
    %v652 = vpack.c.b16 %v618, %v616
    %v653 = vpack.c.b16 %v619, %v617
    %v654 = vpack.c.b16 %v622, %v620
    %v655 = vpack.c.b16 %v623, %v621
    %688 = vmatprep.subr.bf16.mxu0 %v625
    %689 = vmatpush1.bf16.msra.mxu0 %v624
    %690 = vmatprep.subr.bf16.mxu0 %v627
    %691 = vmatpush1.bf16.msra.mxu0 %v626
    %692 = vmatprep.subr.bf16.mxu0 %v629
    %693 = vmatpush1.bf16.msra.mxu0 %v628
    %694 = vmatprep.subr.bf16.mxu0 %v631
    %695 = vmatpush1.bf16.msra.mxu0 %v630
    %696 = vmatprep.subr.bf16.mxu0 %v633
    %697 = vmatpush1.bf16.msra.mxu0 %v632
    %698 = vmatprep.subr.bf16.mxu0 %v635
    %699 = vmatpush1.bf16.msra.mxu0 %v634
    %700 = vmatprep.subr.bf16.mxu0 %v637
    %701 = vmatpush1.bf16.msra.mxu0 %v636
    %702 = vmatprep.subr.bf16.mxu0 %v639
    %703 = vmatpush1.bf16.msra.mxu0 %v638
    %704 = vmatprep.subr.bf16.mxu0 %v641
    %705 = vmatpush1.bf16.msra.mxu0 %v640
    %706 = vmatprep.subr.bf16.mxu0 %v643
    %707 = vmatpush1.bf16.msra.mxu0 %v642
    %708 = vmatprep.subr.bf16.mxu0 %v645
    %709 = vmatpush1.bf16.msra.mxu0 %v644
    %710 = vmatprep.subr.bf16.mxu0 %v647
    %711 = vmatpush1.bf16.msra.mxu0 %v646
    %712 = vmatprep.subr.bf16.mxu0 %v649
    %713 = vmatpush1.bf16.msra.mxu0 %v648
    %714 = vmatprep.subr.bf16.mxu0 %v651
    %715 = vmatpush1.bf16.msra.mxu0 %v650
    %716 = vmatprep.subr.bf16.mxu0 %v653
    %717 = vmatpush1.bf16.msra.mxu0 %v652
    %718 = vmatprep.subr.bf16.mxu0 %v655
    %719 = vmatpush1.bf16.msra.mxu0 %v654
    %720 = vmatprep.mubr.bf16.mxu0 %v483
    %721 = vmatmul.mubr.bf16.gmra.mrb[0].mxu0 %v482
    %v722 = vpop.f32.mrb[0].mxu0
    %v723 = vadd.f32 %v521, %v722
    %v724 = vpop.f32.mrb[0].mxu0
    %v725 = vadd.f32 %v525, %v724
    %v726 = vpop.f32.mrb[0].mxu0
    %v727 = vpop.f32.mrb[0].mxu0
    %728 = vdwg.mxu0
    %v729 = vtanh.pop %v723
    %v730 = vtanh.pop %v725
    %v731 = vpack.c.bf16 %v729, %v729
    %v732 = vpack.c.bf16 %v730, %v730
    %v733 = vld [vmem:[#allocation10] sm:$0xff]
    %v734 = vld [vmem:[#allocation10 + $0x8] sm:$0xff]
    %v735 = vld [vmem:[#allocation10 + $0x10] sm:$0xff]
    %v736 = vld [vmem:[#allocation10 + $0x18] sm:$0xff]
    %v737 = vld [vmem:[#allocation10 + $0x20] sm:$0xff]
    %v738 = vld [vmem:[#allocation10 + $0x28] sm:$0xff]
    %v739 = vld [vmem:[#allocation10 + $0x30] sm:$0xff]
    %v740 = vld [vmem:[#allocation10 + $0x38] sm:$0xff]
    %v741 = vld [vmem:[#allocation10 + $0x40] sm:$0xff]
    %v742 = vld [vmem:[#allocation10 + $0x48] sm:$0xff]
    %v743 = vld [vmem:[#allocation10 + $0x50] sm:$0xff]
    %v744 = vld [vmem:[#allocation10 + $0x58] sm:$0xff]
    %v745 = vld [vmem:[#allocation10 + $0x60] sm:$0xff]
    %v746 = vld [vmem:[#allocation10 + $0x68] sm:$0xff]
    %v747 = vld [vmem:[#allocation10 + $0x70] sm:$0xff]
    %v748 = vld [vmem:[#allocation10 + $0x78] sm:$0xff]
    %v749 = vld [vmem:[#allocation10 + $0x80] sm:$0xff]
    %v750 = vld [vmem:[#allocation10 + $0x88] sm:$0xff]
    %v751 = vld [vmem:[#allocation10 + $0x90] sm:$0xff]
    %v752 = vld [vmem:[#allocation10 + $0x98] sm:$0xff]
    %v753 = vld [vmem:[#allocation10 + $0xa0] sm:$0xff]
    %v754 = vld [vmem:[#allocation10 + $0xa8] sm:$0xff]
    %v755 = vld [vmem:[#allocation10 + $0xb0] sm:$0xff]
    %v756 = vld [vmem:[#allocation10 + $0xb8] sm:$0xff]
    %v757 = vld [vmem:[#allocation10 + $0xc0] sm:$0xff]
    %v758 = vld [vmem:[#allocation10 + $0xc8] sm:$0xff]
    %v759 = vld [vmem:[#allocation10 + $0xd0] sm:$0xff]
    %v760 = vld [vmem:[#allocation10 + $0xd8] sm:$0xff]
    %v761 = vld [vmem:[#allocation10 + $0xe0] sm:$0xff]
    %v762 = vld [vmem:[#allocation10 + $0xe8] sm:$0xff]
    %v763 = vld [vmem:[#allocation10 + $0xf0] sm:$0xff]
    %v764 = vld [vmem:[#allocation10 + $0xf8] sm:$0xff]
    %v765 = vld [vmem:[%s8] sm:$0x3]
    %v767 = vlaneseq
    %v768 = vshrl.u32 %v767, 7
    %v769 = vsub.s32 0, %v768
    %v770 = vrot.slane %v765, %v769
    %v771 = vlaneseq
    %v772 = vshrl.u32 %v771, 7
    %v773 = vsub.s32 1, %v772
    %v774 = vrot.slane %v765, %v773
    %v809 = vunpack.c.l.b16 %v733
    %v810 = vunpack.c.h.b16 %v733
    %v811 = vunpack.c.l.b16 %v734
    %v812 = vunpack.c.h.b16 %v734
    %v813 = vunpack.c.l.b16 %v735
    %v814 = vunpack.c.h.b16 %v735
    %v815 = vunpack.c.l.b16 %v736
    %v816 = vunpack.c.h.b16 %v736
    %v817 = vunpack.c.l.b16 %v737
    %v818 = vunpack.c.h.b16 %v737
    %v819 = vunpack.c.l.b16 %v738
    %v820 = vunpack.c.h.b16 %v738
    %v821 = vunpack.c.l.b16 %v739
    %v822 = vunpack.c.h.b16 %v739
    %v823 = vunpack.c.l.b16 %v740
    %v824 = vunpack.c.h.b16 %v740
    %v825 = vunpack.c.l.b16 %v741
    %v826 = vunpack.c.h.b16 %v741
    %v827 = vunpack.c.l.b16 %v742
    %v828 = vunpack.c.h.b16 %v742
    %v829 = vunpack.c.l.b16 %v743
    %v830 = vunpack.c.h.b16 %v743
    %v831 = vunpack.c.l.b16 %v744
    %v832 = vunpack.c.h.b16 %v744
    %v833 = vunpack.c.l.b16 %v745
    %v834 = vunpack.c.h.b16 %v745
    %v835 = vunpack.c.l.b16 %v746
    %v836 = vunpack.c.h.b16 %v746
    %v837 = vunpack.c.l.b16 %v747
    %v838 = vunpack.c.h.b16 %v747
    %v839 = vunpack.c.l.b16 %v748
    %v840 = vunpack.c.h.b16 %v748
    %v841 = vunpack.c.l.b16 %v749
    %v842 = vunpack.c.h.b16 %v749
    %v843 = vunpack.c.l.b16 %v750
    %v844 = vunpack.c.h.b16 %v750
    %v845 = vunpack.c.l.b16 %v751
    %v846 = vunpack.c.h.b16 %v751
    %v847 = vunpack.c.l.b16 %v752
    %v848 = vunpack.c.h.b16 %v752
    %v849 = vunpack.c.l.b16 %v753
    %v850 = vunpack.c.h.b16 %v753
    %v851 = vunpack.c.l.b16 %v754
    %v852 = vunpack.c.h.b16 %v754
    %v853 = vunpack.c.l.b16 %v755
    %v854 = vunpack.c.h.b16 %v755
    %v855 = vunpack.c.l.b16 %v756
    %v856 = vunpack.c.h.b16 %v756
    %v857 = vunpack.c.l.b16 %v757
    %v858 = vunpack.c.h.b16 %v757
    %v859 = vunpack.c.l.b16 %v758
    %v860 = vunpack.c.h.b16 %v758
    %v861 = vunpack.c.l.b16 %v759
    %v862 = vunpack.c.h.b16 %v759
    %v863 = vunpack.c.l.b16 %v760
    %v864 = vunpack.c.h.b16 %v760
    %v865 = vunpack.c.l.b16 %v761
    %v866 = vunpack.c.h.b16 %v761
    %v867 = vunpack.c.l.b16 %v762
    %v868 = vunpack.c.h.b16 %v762
    %v869 = vunpack.c.l.b16 %v763
    %v870 = vunpack.c.h.b16 %v763
    %v871 = vunpack.c.l.b16 %v764
    %v872 = vunpack.c.h.b16 %v764
    %v873 = vpack.c.b16 %v811, %v809
    %v874 = vpack.c.b16 %v812, %v810
    %v875 = vpack.c.b16 %v815, %v813
    %v876 = vpack.c.b16 %v816, %v814
    %v877 = vpack.c.b16 %v819, %v817
    %v878 = vpack.c.b16 %v820, %v818
    %v879 = vpack.c.b16 %v823, %v821
    %v880 = vpack.c.b16 %v824, %v822
    %v881 = vpack.c.b16 %v827, %v825
    %v882 = vpack.c.b16 %v828, %v826
    %v883 = vpack.c.b16 %v831, %v829
    %v884 = vpack.c.b16 %v832, %v830
    %v885 = vpack.c.b16 %v835, %v833
    %v886 = vpack.c.b16 %v836, %v834
    %v887 = vpack.c.b16 %v839, %v837
    %v888 = vpack.c.b16 %v840, %v838
    %v889 = vpack.c.b16 %v843, %v841
    %v890 = vpack.c.b16 %v844, %v842
    %v891 = vpack.c.b16 %v847, %v845
    %v892 = vpack.c.b16 %v848, %v846
    %v893 = vpack.c.b16 %v851, %v849
    %v894 = vpack.c.b16 %v852, %v850
    %v895 = vpack.c.b16 %v855, %v853
    %v896 = vpack.c.b16 %v856, %v854
    %v897 = vpack.c.b16 %v859, %v857
    %v898 = vpack.c.b16 %v860, %v858
    %v899 = vpack.c.b16 %v863, %v861
    %v900 = vpack.c.b16 %v864, %v862
    %v901 = vpack.c.b16 %v867, %v865
    %v902 = vpack.c.b16 %v868, %v866
    %v903 = vpack.c.b16 %v871, %v869
    %v904 = vpack.c.b16 %v872, %v870
    %937 = vmatprep.subr.bf16.mxu0 %v874
    %938 = vmatpush1.bf16.msra.mxu0 %v873
    %939 = vmatprep.subr.bf16.mxu0 %v876
    %940 = vmatpush1.bf16.msra.mxu0 %v875
    %941 = vmatprep.subr.bf16.mxu0 %v878
    %942 = vmatpush1.bf16.msra.mxu0 %v877
    %943 = vmatprep.subr.bf16.mxu0 %v880
    %944 = vmatpush1.bf16.msra.mxu0 %v879
    %945 = vmatprep.subr.bf16.mxu0 %v882
    %946 = vmatpush1.bf16.msra.mxu0 %v881
    %947 = vmatprep.subr.bf16.mxu0 %v884
    %948 = vmatpush1.bf16.msra.mxu0 %v883
    %949 = vmatprep.subr.bf16.mxu0 %v886
    %950 = vmatpush1.bf16.msra.mxu0 %v885
    %951 = vmatprep.subr.bf16.mxu0 %v888
    %952 = vmatpush1.bf16.msra.mxu0 %v887
    %953 = vmatprep.subr.bf16.mxu0 %v890
    %954 = vmatpush1.bf16.msra.mxu0 %v889
    %955 = vmatprep.subr.bf16.mxu0 %v892
    %956 = vmatpush1.bf16.msra.mxu0 %v891
    %957 = vmatprep.subr.bf16.mxu0 %v894
    %958 = vmatpush1.bf16.msra.mxu0 %v893
    %959 = vmatprep.subr.bf16.mxu0 %v896
    %960 = vmatpush1.bf16.msra.mxu0 %v895
    %961 = vmatprep.subr.bf16.mxu0 %v898
    %962 = vmatpush1.bf16.msra.mxu0 %v897
    %963 = vmatprep.subr.bf16.mxu0 %v900
    %964 = vmatpush1.bf16.msra.mxu0 %v899
    %965 = vmatprep.subr.bf16.mxu0 %v902
    %966 = vmatpush1.bf16.msra.mxu0 %v901
    %967 = vmatprep.subr.bf16.mxu0 %v904
    %968 = vmatpush1.bf16.msra.mxu0 %v903
    %969 = vmatprep.mubr.bf16.mxu0 %v732
    %970 = vmatmul.mubr.bf16.gmra.mrb[0].mxu0 %v731
    %v971 = vpop.f32.mrb[0].mxu0
    %v972 = vadd.f32 %v770, %v971
    %v973 = vpop.f32.mrb[0].mxu0
    %v974 = vadd.f32 %v774, %v973
    %v975 = vpop.f32.mrb[0].mxu0
    %v976 = vpop.f32.mrb[0].mxu0
    %977 = vdwg.mxu0
    %v978 = vtanh.pop %v972
    %v979 = vtanh.pop %v974
    %v980 = vld [vmem:[%s9] sm:$0x3]
    %v982 = vlaneseq
    %v983 = vshrl.u32 %v982, 7
    %v984 = vsub.s32 0, %v983
    %v985 = vrot.slane %v980, %v984
    %v986 = vlaneseq
    %v987 = vshrl.u32 %v986, 7
    %v988 = vsub.s32 1, %v987
    %v989 = vrot.slane %v980, %v988
    %v992 = vmul.f32 %v978, %v985
    %v993 = vmul.f32 %v979, %v989
    %v994 = vadd.f32 %v992, %v993
    %995 = vadd.xlane.f32.xlu0 %v994
    %v996 = vpop.xlane.xlu0 %995
    %v997 = vld [vmem:[#allocation2] sm:$0x1]
    %v999 = vlaneseq
    %v1000 = vshrl.u32 %v999, 7
    %v1001 = vsub.s32 0, %v1000
    %v1002 = vrot.slane %v997, %v1001
    %v1004 = vadd.f32 %v996, %v1002
    %vm1005 = vcmask 7168
    %1006 = vst.msk [vmem:[%s11] sm:$0xff] %vm1005, %v1004
    // Predicated region
    $region66: #{tpu_custom_call.1} parent=1 // pred_check
      _
    $region67: #{tpu_custom_call.1} parent=1 // pred_check_branch
      %1008 = sbr.rel (0) target = $region69
    $region68: #{tpu_custom_call.1} parent=1 // pred_region
      _
    $region69: #{tpu_custom_call.1} parent=1 // pred_fallthru
      _
    // Predicated region
    $region70: #{tpu_custom_call.1} parent=1 // pred_check
      _
    $region71: #{tpu_custom_call.1} parent=1 // pred_check_branch
      %1010 = sbr.rel (0) target = $region73
    $region72: #{tpu_custom_call.1} parent=1 // pred_region
      _
    $region73: #{tpu_custom_call.1} parent=1 // pred_fallthru
      _
    %1011 = vsyncpa [#allocation4], 1
    %1012 = vsyncpa [#allocation6], 1
    %1013 = vsyncpa [#allocation9], 1

</llo_original>
